<compile_context>
chip_gen: v6e
topology: v6e:2x2x1
jax: 0.10.0
libtpu: 0.0.40
codegen_flags: <defaults>
</compile_context>

<pallas_src>
import functools

import jax
import jax.numpy as jnp
from jax.experimental import pallas as pl
from jax.experimental.pallas import tpu as pltpu


def _round_up(n: int, m: int) -> int:
    return (n + m - 1) // m * m


def value_net_kernel(x_ref, w1_ref, b1_ref, w2_ref, b2_ref, w3_ref, b3_ref, o_ref):
    """One batch tile: o = fc3(relu(fc2(relu(fc1(x)))))."""
    x = x_ref[...]                                                   # [TM, S]

    # Layer 1 (MXU): [TM, S] @ [S, H]; bias + ReLU on the VPU in f32.
    h1 = jnp.dot(x, w1_ref[...], preferred_element_type=jnp.float32)
    h1 = jnp.maximum(h1 + b1_ref[...], 0.0)                          # [TM, H]

    # Layer 2 (MXU): [TM, H] @ [H, H].
    h2 = jnp.dot(h1, w2_ref[...], preferred_element_type=jnp.float32)
    h2 = jnp.maximum(h2 + b2_ref[...], 0.0)                          # [TM, H]

    # Layer 3: single output column -> VPU multiply + XLU lane reduce.
    # (An MXU matmul with N=1 would cost as many pushes as the full 128-wide
    # layer-2 matmul.)  b3 is a scalar read from SMEM.
    v = jnp.sum(h2 * w3_ref[...], axis=-1, keepdims=True) + b3_ref[0]  # [TM, 1]
    o_ref[...] = v.astype(o_ref.dtype)
    # TODO(synk): a lane-dense (1, TM) output layout would need a sublane->lane
    # relayout of `v`; skipped since the kernel is MXU-bound and the (TM, 1)
    # masked store hides in otherwise-idle store slots.


@functools.partial(jax.jit, static_argnames=("block_rows",))
def value_network_forward(state, prepared, *, block_rows=512):
    """state: [B, state_dim] f32; prepared: output of prepare_value_network_params."""
    B, S = state.shape
    hp = prepared["w1"].shape[1]

    # Batch tile: multiple of 8 sublanes; default 512 (multiple of 128 and 256,
    # sized with headroom for v7x's 64 MiB VMEM even with double buffering).
    tm = min(block_rows, _round_up(B, 8))
    bp = _round_up(B, tm)
    if bp != B:
        state = jnp.pad(state, ((0, bp - B), (0, 0)))

    out = pl.pallas_call(
        value_net_kernel,
        out_shape=jax.ShapeDtypeStruct((bp, 1), jnp.float32),
        grid_spec=pltpu.PrefetchScalarGridSpec(
            num_scalar_prefetch=0,
            grid=(bp // tm,),
            in_specs=[
                # x: streamed batch tiles (double-buffered by the pipeline).
                pl.BlockSpec((tm, S), lambda i: (i, 0)),
                # weights / biases: same block every step -> stay VMEM-resident.
                pl.BlockSpec((S, hp), lambda i: (0, 0)),
                pl.BlockSpec((1, hp), lambda i: (0, 0)),
                pl.BlockSpec((hp, hp), lambda i: (0, 0)),
                pl.BlockSpec((1, hp), lambda i: (0, 0)),
                pl.BlockSpec((1, hp), lambda i: (0, 0)),
                # b3: single scalar in SMEM (no padded VMEM tile / extra DMA).
                pl.BlockSpec(memory_space=pltpu.MemorySpace.SMEM),
            ],
            out_specs=pl.BlockSpec((tm, 1), lambda i: (i, 0)),
        ),
        compiler_params=pltpu.CompilerParams(
            # Batch tiles are independent -> shard across TCs on v7x.
            dimension_semantics=("parallel",),
            # Explicit, generation-safe VMEM budget (< v7x's 64 MiB per core).
            vmem_limit_bytes=48 * 1024 * 1024,
        ),
    )(
        state,
        prepared["w1"], prepared["b1"],
        prepared["w2"], prepared["b2"],
        prepared["w3_row"], prepared["b3"],
    )
    return out[:B]


def prepare_value_network_params(params, lane_width=128):
    """Zero-pad the hidden dim to a multiple of 128 lanes and reshape for the kernel.

    Padded weight/bias entries are zero and ReLU(0) == 0, so the real output is
    bit-identical to the unpadded network.  Call once, reuse across forwards.
    """
    w1, b1 = params["w1"], params["b1"]
    w2, b2 = params["w2"], params["b2"]
    w3, b3 = params["w3"], params["b3"]
    h = w1.shape[1]
    hp = _round_up(h, lane_width)
    pad_cols = lambda a: jnp.pad(a, ((0, 0), (0, hp - a.shape[1])))
    return {
        "w1": pad_cols(w1),                             # [S, hp]
        "b1": pad_cols(b1.reshape(1, h)),               # [1, hp]
        "w2": jnp.pad(w2, ((0, hp - h), (0, hp - h))),  # [hp, hp]
        "b2": pad_cols(b2.reshape(1, h)),               # [1, hp]
        "w3_row": pad_cols(w3.reshape(1, h)),           # [1, hp]  (w3 was [h, 1])
        "b3": b3.reshape(1),                            # [1] scalar, goes to SMEM
    }


def xavier_uniform(key, fan_in, fan_out, dtype=jnp.float32):
    # Matches torch.nn.init.xavier_uniform_ (gain=1).
    limit = float(jnp.sqrt(6.0 / (fan_in + fan_out)))
    return jax.random.uniform(key, (fan_in, fan_out), dtype, -limit, limit)


def init_value_network_params(key, state_dim, hidden_dim):
    k1, k2, k3 = jax.random.split(key, 3)
    return {
        "w1": xavier_uniform(k1, state_dim, hidden_dim),
        "b1": jnp.zeros((hidden_dim,), jnp.float32),
        "w2": xavier_uniform(k2, hidden_dim, hidden_dim),
        "b2": jnp.zeros((hidden_dim,), jnp.float32),
        "w3": xavier_uniform(k3, hidden_dim, 1),
        "b3": jnp.zeros((1,), jnp.float32),
    }


if __name__ == "__main__":
    state_dim, hidden_dim, batch = 4, 32, 8

    key = jax.random.PRNGKey(0)
    pkey, xkey = jax.random.split(key)
    params = init_value_network_params(pkey, state_dim, hidden_dim)
    prepared = prepare_value_network_params(params)
    state = jax.random.normal(xkey, (batch, state_dim), dtype=jnp.float32)

    out = value_network_forward(state, prepared)
    out = jax.block_until_ready(out)

    # Pure-JAX reference (unpadded params, same math as the PyTorch module).
    h = jnp.maximum(state @ params["w1"] + params["b1"], 0.0)
    h = jnp.maximum(h @ params["w2"] + params["b2"], 0.0)
    ref = h @ params["w3"] + params["b3"]

    assert out.shape == (batch, 1), out.shape
    assert jnp.allclose(out, ref, atol=1e-5), "mismatch vs reference"
    print("KERNEL_OK")
</pallas_src>

<mosaic_0001>
module attributes {stable_mosaic.version = 11 : i64} {
  func.func @value_net_kernel(%arg0: i32, %arg1: memref<8x4xf32, #tpu.memory_space<vmem>>, %arg2: memref<4x128xf32, #tpu.memory_space<vmem>>, %arg3: memref<1x128xf32, #tpu.memory_space<vmem>>, %arg4: memref<128x128xf32, #tpu.memory_space<vmem>>, %arg5: memref<1x128xf32, #tpu.memory_space<vmem>>, %arg6: memref<1x128xf32, #tpu.memory_space<vmem>>, %arg7: memref<1xf32, #tpu.memory_space<smem>>, %arg8: memref<8x1xf32, #tpu.memory_space<vmem>>) attributes {dimension_semantics = [#tpu.dimension_semantics<parallel>], iteration_bounds = array<i64: 1>, scalar_prefetch = 0 : i64, scratch_operands = 0 : i64, tpu.core_type = #tpu.core_type<tc>, window_params = [{transform_indices = @transform_0, window_bounds = array<i64: 8, 4>}, {pipeline_mode = #tpu.pipeline_mode<synchronous>, transform_indices = @transform_1, window_bounds = array<i64: 4, 128>}, {pipeline_mode = #tpu.pipeline_mode<synchronous>, transform_indices = @transform_2, window_bounds = array<i64: 1, 128>}, {pipeline_mode = #tpu.pipeline_mode<synchronous>, transform_indices = @transform_3, window_bounds = array<i64: 128, 128>}, {pipeline_mode = #tpu.pipeline_mode<synchronous>, transform_indices = @transform_4, window_bounds = array<i64: 1, 128>}, {pipeline_mode = #tpu.pipeline_mode<synchronous>, transform_indices = @transform_5, window_bounds = array<i64: 1, 128>}, {transform_indices = @transform_6, window_bounds = array<i64: 1>}, {transform_indices = @transform_7, window_bounds = array<i64: 8, 1>}]} {
    %c0 = arith.constant 0 : index
    %c0_0 = arith.constant 0 : index
    %0 = vector.load %arg1[%c0, %c0_0] : memref<8x4xf32, #tpu.memory_space<vmem>>, vector<8x4xf32>
    %c0_1 = arith.constant 0 : index
    %c0_2 = arith.constant 0 : index
    %1 = vector.load %arg2[%c0_1, %c0_2] : memref<4x128xf32, #tpu.memory_space<vmem>>, vector<4x128xf32>
    %cst = arith.constant dense<0.000000e+00> : vector<8x128xf32>
    %2 = tpu.matmul %0, %1, %cst {dimension_numbers = #tpu.dot_dimension_numbers<[1], [0], [0], [1], [0, 0, 1, 1], [], []>} : vector<8x4xf32>, vector<4x128xf32>, vector<8x128xf32> -> vector<8x128xf32>
    %c0_3 = arith.constant 0 : index
    %c0_4 = arith.constant 0 : index
    %3 = vector.load %arg3[%c0_3, %c0_4] : memref<1x128xf32, #tpu.memory_space<vmem>>, vector<1x128xf32>
    %4 = vector.broadcast %3 : vector<1x128xf32> to vector<8x128xf32>
    %5 = arith.addf %2, %4 : vector<8x128xf32>
    %cst_5 = arith.constant 0.000000e+00 : f32
    %6 = vector.broadcast %cst_5 : f32 to vector<8x128xf32>
    %7 = arith.maximumf %5, %6 : vector<8x128xf32>
    %c0_6 = arith.constant 0 : index
    %c0_7 = arith.constant 0 : index
    %8 = vector.load %arg4[%c0_6, %c0_7] : memref<128x128xf32, #tpu.memory_space<vmem>>, vector<128x128xf32>
    %cst_8 = arith.constant dense<0.000000e+00> : vector<8x128xf32>
    %9 = tpu.matmul %7, %8, %cst_8 {dimension_numbers = #tpu.dot_dimension_numbers<[1], [0], [0], [1], [0, 0, 1, 1], [], []>} : vector<8x128xf32>, vector<128x128xf32>, vector<8x128xf32> -> vector<8x128xf32>
    %c0_9 = arith.constant 0 : index
    %c0_10 = arith.constant 0 : index
    %10 = vector.load %arg5[%c0_9, %c0_10] : memref<1x128xf32, #tpu.memory_space<vmem>>, vector<1x128xf32>
    %11 = vector.broadcast %10 : vector<1x128xf32> to vector<8x128xf32>
    %12 = arith.addf %9, %11 : vector<8x128xf32>
    %cst_11 = arith.constant 0.000000e+00 : f32
    %13 = vector.broadcast %cst_11 : f32 to vector<8x128xf32>
    %14 = arith.maximumf %12, %13 : vector<8x128xf32>
    %c0_12 = arith.constant 0 : index
    %c0_13 = arith.constant 0 : index
    %15 = vector.load %arg6[%c0_12, %c0_13] : memref<1x128xf32, #tpu.memory_space<vmem>>, vector<1x128xf32>
    %16 = vector.broadcast %15 : vector<1x128xf32> to vector<8x128xf32>
    %17 = arith.mulf %14, %16 : vector<8x128xf32>
    %cst_14 = arith.constant dense<0.000000e+00> : vector<8xf32>
    %18 = vector.multi_reduction <add>, %17, %cst_14 [1] : vector<8x128xf32> to vector<8xf32>
    %19 = vector.shape_cast %18 : vector<8xf32> to vector<8x1xf32>
    %c0_15 = arith.constant 0 : index
    %20 = memref.load %arg7[%c0_15] : memref<1xf32, #tpu.memory_space<smem>>
    %21 = vector.broadcast %20 : f32 to vector<8x1xf32>
    %22 = arith.addf %19, %21 : vector<8x1xf32>
    %c0_16 = arith.constant 0 : index
    %c0_17 = arith.constant 0 : index
    %23 = vector.load %arg8[%c0_16, %c0_17] : memref<8x1xf32, #tpu.memory_space<vmem>>, vector<8x1xf32>
    tpu.vector_store %arg8[%c0_16, %c0_17], %22 {strides = array<i32>} : memref<8x1xf32, #tpu.memory_space<vmem>>, vector<8x1xf32>,
    return
  }
  func.func @transform_0(%arg0: i32) -> (i32, i32) {
    %c0_i32 = arith.constant 0 : i32
    %c0_i32_0 = arith.constant 0 : i32
    return %arg0, %c0_i32 : i32, i32
  }
  func.func @transform_1(%arg0: i32) -> (i32, i32) {
    %c0_i32 = arith.constant 0 : i32
    %c0_i32_0 = arith.constant 0 : i32
    %c0_i32_1 = arith.constant 0 : i32
    return %c0_i32, %c0_i32_0 : i32, i32
  }
  func.func @transform_2(%arg0: i32) -> (i32, i32) {
    %c0_i32 = arith.constant 0 : i32
    %c0_i32_0 = arith.constant 0 : i32
    %c0_i32_1 = arith.constant 0 : i32
    return %c0_i32, %c0_i32_0 : i32, i32
  }
  func.func @transform_3(%arg0: i32) -> (i32, i32) {
    %c0_i32 = arith.constant 0 : i32
    %c0_i32_0 = arith.constant 0 : i32
    %c0_i32_1 = arith.constant 0 : i32
    return %c0_i32, %c0_i32_0 : i32, i32
  }
  func.func @transform_4(%arg0: i32) -> (i32, i32) {
    %c0_i32 = arith.constant 0 : i32
    %c0_i32_0 = arith.constant 0 : i32
    %c0_i32_1 = arith.constant 0 : i32
    return %c0_i32, %c0_i32_0 : i32, i32
  }
  func.func @transform_5(%arg0: i32) -> (i32, i32) {
    %c0_i32 = arith.constant 0 : i32
    %c0_i32_0 = arith.constant 0 : i32
    %c0_i32_1 = arith.constant 0 : i32
    return %c0_i32, %c0_i32_0 : i32, i32
  }
  func.func @transform_6(%arg0: i32) -> i32 {
    %c0_i32 = arith.constant 0 : i32
    %c0_i32_0 = arith.constant 0 : i32
    return %c0_i32 : i32
  }
  func.func @transform_7(%arg0: i32) -> (i32, i32) {
    %c0_i32 = arith.constant 0 : i32
    %c0_i32_0 = arith.constant 0 : i32
    return %arg0, %c0_i32 : i32, i32
  }
}

</mosaic_0001>

<llo_original>
// kernel: value_network_forward.1
$region0: #{value_network_forward.1}
  #allocation0 [shape = 'u32[]', space=smem, size = 0x4, offset = 0x4, fixed_abs, tag = 'smem constant byte address 0x4 - core index']
  #allocation1 [shape = 'u32[144,128]{1,0:T(1,128)}', space=vmem, size = 0x12000, scoped, tag = 'internal scratch']
  #allocation2 [shape = 'f32[1]{0:T(128)S(6)}', space=smem, size = 0x200, scoped, tag = 'scoped memory for value_network_forward.1']
  %s0 = inlined_call_operand.vmem [shape: f32[8,4], index: 0, kind: input, shape index: {}]
  %s1 = inlined_call_operand.vmem [shape: f32[4,128], index: 1, kind: input, shape index: {}]
  %s2 = inlined_call_operand.vmem [shape: f32[1,128], index: 2, kind: input, shape index: {}]
  %s3 = inlined_call_operand.hbm [shape: f32[128,128], index: 3, kind: input, shape index: {}]
  %s4 = inlined_call_operand.vmem [shape: f32[1,128], index: 4, kind: input, shape index: {}]
  %s5 = inlined_call_operand.vmem [shape: f32[1,128], index: 5, kind: input, shape index: {}]
  %s6 = inlined_call_operand.<no memory space> [shape: f32[1], index: 6, kind: input, shape index: {}]
  %s7 = inlined_call_operand.vmem [shape: f32[8,1], index: 7, kind: output, shape index: {}]
  %s8 = sld [smem:[#allocation0]]
  $region42: #{value_network_forward.1} parent=0
    _
  %s10 = ssub.s32 1, %s8
  %s11 = scalar_select 0, %s10, %s8
  %12 = sst [smem:[#allocation2]] %s6
  $region1: #{value_network_forward.1} parent=0
    #allocation3 [shape = 'u8[65536]{0}', space=vmem, size = 0x10000, scoped, tag = 'input window, operand 3, single buffered']
    #allocation4 [shape = 's32[1]{0}', space=sflag, size = 0x4, scoped, tag = 'scoped memory for value_network_forward.1']
    %13 = vsyncpa [#allocation4], 0
    // Predicated region
    $region2: #{value_network_forward.1} parent=1 // pred_check
      _
    $region3: #{value_network_forward.1} parent=1 // pred_check_branch
      %15 = sbr.rel (0) target = $region5
    $region4: #{value_network_forward.1} parent=1 // pred_region
      _
    $region5: #{value_network_forward.1} parent=1 // pred_fallthru
      _
    // Predicated region
    $region6: #{value_network_forward.1} parent=1 // pred_check
      _
    $region7: #{value_network_forward.1} parent=1 // pred_check_branch
      %17 = sbr.rel (0) target = $region9
    $region8: #{value_network_forward.1} parent=1 // pred_region
      _
    $region9: #{value_network_forward.1} parent=1 // pred_fallthru
      _
    // Predicated region
    $region10: #{value_network_forward.1} parent=1 // pred_check
      _
    $region11: #{value_network_forward.1} parent=1 // pred_check_branch
      %19 = sbr.rel (0) target = $region13
    $region12: #{value_network_forward.1} parent=1 // pred_region
      _
    $region13: #{value_network_forward.1} parent=1 // pred_fallthru
      _
    // Predicated region
    $region14: #{value_network_forward.1} parent=1 // pred_check
      _
    $region15: #{value_network_forward.1} parent=1 // pred_check_branch
      %21 = sbr.rel (0) target = $region17
    $region16: #{value_network_forward.1} parent=1 // pred_region
      %s23 = ssub.s32 2048, 2048
      %24 = vsyncadd [#allocation4], %s23
      %s25 = sshll.u32 [#allocation3], 4
      %s26 = int_to_ptr.vmem [resolvable:$true] %s25
      %31 = dma.hbm_to_vmem [thread:$0]  %s3, 2048, %s26, [#allocation4], 128, 128, 8
    $region17: #{value_network_forward.1} parent=1 // pred_fallthru
      _
    // Predicated region
    $region18: #{value_network_forward.1} parent=1 // pred_check
      _
    $region19: #{value_network_forward.1} parent=1 // pred_check_branch
      %33 = sbr.rel (0) target = $region21
    $region20: #{value_network_forward.1} parent=1 // pred_region
      _
    $region21: #{value_network_forward.1} parent=1 // pred_fallthru
      _
    // Predicated region
    $region22: #{value_network_forward.1} parent=1 // pred_check
      _
    $region23: #{value_network_forward.1} parent=1 // pred_check_branch
      %35 = sbr.rel (0) target = $region25
    $region24: #{value_network_forward.1} parent=1 // pred_region
      _
    $region25: #{value_network_forward.1} parent=1 // pred_fallthru
      _
    // Predicated region
    $region26: #{value_network_forward.1} parent=1 // pred_check
      _
    $region27: #{value_network_forward.1} parent=1 // pred_check_branch
      %37 = sbr.rel (0) target = $region29
    $region28: #{value_network_forward.1} parent=1 // pred_region
      _
    $region29: #{value_network_forward.1} parent=1 // pred_fallthru
      _
    // Predicated region
    $region30: #{value_network_forward.1} parent=1 // pred_check
      _
    $region31: #{value_network_forward.1} parent=1 // pred_check_branch
      %39 = sbr.rel (0) target = $region33
    $region32: #{value_network_forward.1} parent=1 // pred_region
      %40 = dma.done [#allocation4], 2048
    $region33: #{value_network_forward.1} parent=1 // pred_fallthru
      _
    %v41 = vld [vmem:[%s0] sm:$0xff]
    %v42 = vld [vmem:[%s1] sm:$0xf]
    %v43 = vld [vmem:[%s2] sm:$0x1]
    %v45 = vlaneseq
    %v46 = vshrl.u32 %v45, 7
    %v47 = vsub.s32 0, %v46
    %v48 = vrot.slane %v43, %v47
    %vm50 = vcmask 31744
    %v52 = vsel %vm50, %v41, 0
    %vm54 = vcmask 1043456
    %v56 = vsel %vm54, %v42, 0
    %58 = vmatprep.subr.mxu0 0.0
    %59 = vmatpush1.msra.mxu0 0.0
    %60 = vmatprep.subr.mxu0 0.0
    %61 = vmatpush1.msra.mxu0 0.0
    %62 = vmatprep.subr.mxu0 0.0
    %63 = vmatpush1.msra.mxu0 0.0
    %64 = vmatprep.subr.mxu0 0.0
    %65 = vmatpush1.msra.mxu0 0.0
    %66 = vmatprep.subr.mxu0 0.0
    %67 = vmatpush1.msra.mxu0 0.0
    %68 = vmatprep.subr.mxu0 0.0
    %69 = vmatpush1.msra.mxu0 0.0
    %70 = vmatprep.subr.mxu0 0.0
    %71 = vmatpush1.msra.mxu0 0.0
    %72 = vmatprep.subr.mxu0 0.0
    %73 = vmatpush1.msra.mxu0 0.0
    %74 = vmatprep.subr.mxu0 0.0
    %75 = vmatpush1.msra.mxu0 0.0
    %76 = vmatprep.subr.mxu0 0.0
    %77 = vmatpush1.msra.mxu0 0.0
    %78 = vmatprep.subr.mxu0 0.0
    %79 = vmatpush1.msra.mxu0 0.0
    %80 = vmatprep.subr.mxu0 0.0
    %81 = vmatpush1.msra.mxu0 0.0
    %82 = vmatprep.subr.mxu0 0.0
    %83 = vmatpush1.msra.mxu0 0.0
    %84 = vmatprep.subr.mxu0 0.0
    %85 = vmatpush1.msra.mxu0 0.0
    %86 = vmatprep.subr.mxu0 0.0
    %87 = vmatpush1.msra.mxu0 0.0
    %88 = vmatprep.subr.mxu0 0.0
    %89 = vmatpush1.msra.mxu0 %v56
    %90 = vmatprep.subr.mxu0 0.0
    %91 = vmatpush2.msra.mxu0 0.0
    %92 = vmatprep.subr.mxu0 0.0
    %93 = vmatpush2.msra.mxu0 0.0
    %94 = vmatprep.subr.mxu0 0.0
    %95 = vmatpush2.msra.mxu0 0.0
    %96 = vmatprep.subr.mxu0 0.0
    %97 = vmatpush2.msra.mxu0 0.0
    %98 = vmatprep.subr.mxu0 0.0
    %99 = vmatpush2.msra.mxu0 0.0
    %100 = vmatprep.subr.mxu0 0.0
    %101 = vmatpush2.msra.mxu0 0.0
    %102 = vmatprep.subr.mxu0 0.0
    %103 = vmatpush2.msra.mxu0 0.0
    %104 = vmatprep.subr.mxu0 0.0
    %105 = vmatpush2.msra.mxu0 0.0
    %106 = vmatprep.subr.mxu0 0.0
    %107 = vmatpush2.msra.mxu0 0.0
    %108 = vmatprep.subr.mxu0 0.0
    %109 = vmatpush2.msra.mxu0 0.0
    %110 = vmatprep.subr.mxu0 0.0
    %111 = vmatpush2.msra.mxu0 0.0
    %112 = vmatprep.subr.mxu0 0.0
    %113 = vmatpush2.msra.mxu0 0.0
    %114 = vmatprep.subr.mxu0 0.0
    %115 = vmatpush2.msra.mxu0 0.0
    %116 = vmatprep.subr.mxu0 0.0
    %117 = vmatpush2.msra.mxu0 0.0
    %118 = vmatprep.subr.mxu0 0.0
    %119 = vmatpush2.msra.mxu0 0.0
    %120 = vmatprep.subr.mxu0 0.0
    %121 = vmatpush2.msra.mxu0 0.0
    %122 = vmatprep.mubr.f32.mxu0 0.0
    %123 = vmatmul.mubr.f32.gmra.mxu0 %v52
    %v124 = vpop.f32.mrf.mxu0
    %v125 = vadd.f32 %v48, %v124
    %v126 = vpop.f32.mrf.mxu0
    %127 = vdwg.mxu0
    %v128 = vmax.f32 %v125, 0.0
    %v129 = vld [vmem:[#allocation3] sm:$0xff]
    %v130 = vld [vmem:[#allocation3 + $0x8] sm:$0xff]
    %v131 = vld [vmem:[#allocation3 + $0x10] sm:$0xff]
    %v132 = vld [vmem:[#allocation3 + $0x18] sm:$0xff]
    %v133 = vld [vmem:[#allocation3 + $0x20] sm:$0xff]
    %v134 = vld [vmem:[#allocation3 + $0x28] sm:$0xff]
    %v135 = vld [vmem:[#allocation3 + $0x30] sm:$0xff]
    %v136 = vld [vmem:[#allocation3 + $0x38] sm:$0xff]
    %v137 = vld [vmem:[#allocation3 + $0x40] sm:$0xff]
    %v138 = vld [vmem:[#allocation3 + $0x48] sm:$0xff]
    %v139 = vld [vmem:[#allocation3 + $0x50] sm:$0xff]
    %v140 = vld [vmem:[#allocation3 + $0x58] sm:$0xff]
    %v141 = vld [vmem:[#allocation3 + $0x60] sm:$0xff]
    %v142 = vld [vmem:[#allocation3 + $0x68] sm:$0xff]
    %v143 = vld [vmem:[#allocation3 + $0x70] sm:$0xff]
    %v144 = vld [vmem:[#allocation3 + $0x78] sm:$0xff]
    %v145 = vld [vmem:[%s4] sm:$0x1]
    %v147 = vlaneseq
    %v148 = vshrl.u32 %v147, 7
    %v149 = vsub.s32 0, %v148
    %v150 = vrot.slane %v145, %v149
    %152 = vmatprep.subr.mxu0 0.0
    %153 = vmatpush1.msra.mxu0 %v144
    %154 = vmatprep.subr.mxu0 0.0
    %155 = vmatpush1.msra.mxu0 %v143
    %156 = vmatprep.subr.mxu0 0.0
    %157 = vmatpush1.msra.mxu0 %v142
    %158 = vmatprep.subr.mxu0 0.0
    %159 = vmatpush1.msra.mxu0 %v141
    %160 = vmatprep.subr.mxu0 0.0
    %161 = vmatpush1.msra.mxu0 %v140
    %162 = vmatprep.subr.mxu0 0.0
    %163 = vmatpush1.msra.mxu0 %v139
    %164 = vmatprep.subr.mxu0 0.0
    %165 = vmatpush1.msra.mxu0 %v138
    %166 = vmatprep.subr.mxu0 0.0
    %167 = vmatpush1.msra.mxu0 %v137
    %168 = vmatprep.subr.mxu0 0.0
    %169 = vmatpush1.msra.mxu0 %v136
    %170 = vmatprep.subr.mxu0 0.0
    %171 = vmatpush1.msra.mxu0 %v135
    %172 = vmatprep.subr.mxu0 0.0
    %173 = vmatpush1.msra.mxu0 %v134
    %174 = vmatprep.subr.mxu0 0.0
    %175 = vmatpush1.msra.mxu0 %v133
    %176 = vmatprep.subr.mxu0 0.0
    %177 = vmatpush1.msra.mxu0 %v132
    %178 = vmatprep.subr.mxu0 0.0
    %179 = vmatpush1.msra.mxu0 %v131
    %180 = vmatprep.subr.mxu0 0.0
    %181 = vmatpush1.msra.mxu0 %v130
    %182 = vmatprep.subr.mxu0 0.0
    %183 = vmatpush1.msra.mxu0 %v129
    %184 = vmatprep.subr.mxu0 0.0
    %185 = vmatpush2.msra.mxu0 0.0
    %186 = vmatprep.subr.mxu0 0.0
    %187 = vmatpush2.msra.mxu0 0.0
    %188 = vmatprep.subr.mxu0 0.0
    %189 = vmatpush2.msra.mxu0 0.0
    %190 = vmatprep.subr.mxu0 0.0
    %191 = vmatpush2.msra.mxu0 0.0
    %192 = vmatprep.subr.mxu0 0.0
    %193 = vmatpush2.msra.mxu0 0.0
    %194 = vmatprep.subr.mxu0 0.0
    %195 = vmatpush2.msra.mxu0 0.0
    %196 = vmatprep.subr.mxu0 0.0
    %197 = vmatpush2.msra.mxu0 0.0
    %198 = vmatprep.subr.mxu0 0.0
    %199 = vmatpush2.msra.mxu0 0.0
    %200 = vmatprep.subr.mxu0 0.0
    %201 = vmatpush2.msra.mxu0 0.0
    %202 = vmatprep.subr.mxu0 0.0
    %203 = vmatpush2.msra.mxu0 0.0
    %204 = vmatprep.subr.mxu0 0.0
    %205 = vmatpush2.msra.mxu0 0.0
    %206 = vmatprep.subr.mxu0 0.0
    %207 = vmatpush2.msra.mxu0 0.0
    %208 = vmatprep.subr.mxu0 0.0
    %209 = vmatpush2.msra.mxu0 0.0
    %210 = vmatprep.subr.mxu0 0.0
    %211 = vmatpush2.msra.mxu0 0.0
    %212 = vmatprep.subr.mxu0 0.0
    %213 = vmatpush2.msra.mxu0 0.0
    %214 = vmatprep.subr.mxu0 0.0
    %215 = vmatpush2.msra.mxu0 0.0
    %216 = vmatprep.mubr.f32.mxu0 0.0
    %217 = vmatmul.mubr.f32.gmra.mxu0 %v128
    %v218 = vpop.f32.mrf.mxu0
    %v219 = vadd.f32 %v150, %v218
    %v220 = vpop.f32.mrf.mxu0
    %221 = vdwg.mxu0
    %v222 = vmax.f32 %v219, 0.0
    %v223 = vld [vmem:[%s5] sm:$0x1]
    %v225 = vlaneseq
    %v226 = vshrl.u32 %v225, 7
    %v227 = vsub.s32 0, %v226
    %v228 = vrot.slane %v223, %v227
    %v230 = vmul.f32 %v222, %v228
    %231 = vadd.xlane.f32.xlu0 %v230
    %v232 = vpop.xlane.xlu0 %231
    %s233 = sld [smem:[#allocation2]]
    %v234 = vstv %s233
    %v235 = vadd.f32 %v232, %v234
    %vm236 = vcmask 7168
    %237 = vst.msk [vmem:[%s7] sm:$0xff] %vm236, %v235
    // Predicated region
    $region34: #{value_network_forward.1} parent=1 // pred_check
      _
    $region35: #{value_network_forward.1} parent=1 // pred_check_branch
      %239 = sbr.rel (0) target = $region37
    $region36: #{value_network_forward.1} parent=1 // pred_region
      _
    $region37: #{value_network_forward.1} parent=1 // pred_fallthru
      _
    // Predicated region
    $region38: #{value_network_forward.1} parent=1 // pred_check
      _
    $region39: #{value_network_forward.1} parent=1 // pred_check_branch
      %241 = sbr.rel (0) target = $region41
    $region40: #{value_network_forward.1} parent=1 // pred_region
      _
    $region41: #{value_network_forward.1} parent=1 // pred_fallthru
      _
    %242 = vsyncpa [#allocation4], 1

</llo_original>
